<compile_context>
chip_gen: v7x
topology: tpu7x:2x2x1
jax: 0.10.0
libtpu: 0.0.40
codegen_flags: <defaults>
</compile_context>

<pallas_src>
import functools

import numpy as np
import jax
import jax.numpy as jnp
from jax import lax
from jax.experimental import pallas as pl
from jax.experimental.pallas import tpu as pltpu

_LANES = 128
_MIB = 1024 * 1024


def _round_up(x, m):
    return (x + m - 1) // m * m


def _vmem_capacity_bytes():
    try:
        return int(pltpu.get_tpu_info().vmem_capacity_bytes)
    except Exception:
        return 64 * _MIB  # conservative default (v7x per-core VMEM)


# ----------------------------------------------------------------------------
# kernels
# ----------------------------------------------------------------------------
def _classify_single_kernel(x_ref, w_ref, b_ref, o_ref, *, inv_hw):
    """Whole (N, C1, HW) tensor resident in VMEM: pool + 1x1 conv + bias."""
    pooled = jnp.sum(x_ref[...], axis=-1, dtype=jnp.float32) * inv_hw   # (N, C1)
    w = w_ref[...]
    y = jnp.dot(pooled.astype(w.dtype), w, preferred_element_type=jnp.float32)
    o_ref[...] = (y + b_ref[...].astype(jnp.float32)).astype(o_ref.dtype)


def _classify_tiled_kernel(x_ref, w_ref, b_ref, o_ref, acc_ref, *,
                           inv_hw, hw, ts, nsteps, need_mask):
    # grid = (batch_blocks, spatial_splits, spatial_steps)
    p = pl.program_id(1)            # spatial split ("parallel": 2nd TC on v7x)
    s = pl.program_id(2)            # spatial step  ("arbitrary" reduction)

    @pl.when(s == 0)
    def _init():
        acc_ref[...] = jnp.zeros_like(acc_ref)

    xb = x_ref[...]                                        # (bn, C1, ts) native dtype
    if need_mask:
        # Ragged tail / phantom steps: OOB lanes contain garbage -> zero them.
        gstep = p * nsteps + s
        lane = lax.broadcasted_iota(jnp.int32, (1, 1, ts), 2)
        xb = jnp.where(lane < (hw - gstep * ts), xb, jnp.zeros_like(xb))
    acc_ref[...] += jnp.sum(xb, axis=-1, dtype=jnp.float32)

    @pl.when(s == nsteps - 1)
    def _finalize():
        pooled = acc_ref[...] * inv_hw                     # partial mean (bn, C1) f32
        w = w_ref[...]
        y = jnp.dot(pooled.astype(w.dtype), w, preferred_element_type=jnp.float32)
        # bias applied exactly once (only in the p == 0 partial)
        y = y + b_ref[...].astype(jnp.float32) * (p == 0).astype(jnp.float32)
        o_ref[...] = y[None].astype(o_ref.dtype)


# ----------------------------------------------------------------------------
# tiling plan + fused launcher
# ----------------------------------------------------------------------------
def _pick_batch_tile(N, C1, itemsize, budget):
    """Batch tile bn so a (bn, C1, 128) block fits the budget; bn divides N."""
    if N * C1 * _LANES * itemsize <= budget:
        return N
    max_bn = max(budget // (C1 * _LANES * itemsize), 1)
    for bn in range(min(max_bn, N) // 8 * 8, 0, -8):   # multiple-of-8 divisors
        if N % bn == 0:
            return bn
    # TODO(synk): no multiple-of-8 divisor fits; accept the full batch block
    # (vmem_limit stays clamped to physical VMEM).
    return N


def _classify_fused(x, w, b, *, block_budget_bytes=None):
    """x: (N, C1, H, W) NCHW -> (N, C2) = mean(x, HW) @ w + b (fully fused)."""
    N, C1, H, W = x.shape
    C2 = w.shape[1]
    hw = H * W
    itemsize = x.dtype.itemsize

    vmem_cap = _vmem_capacity_bytes()
    budget = block_budget_bytes
    if budget is None:
        budget = min(12 * _MIB, vmem_cap // 6)   # generation-aware block budget

    xf = x.reshape(N, C1, hw)                    # free reshape (collapse minor dims)
    bvec = b.reshape(1, C2)
    hwp = _round_up(hw, _LANES)

    cost = pl.CostEstimate(
        flops=int(2 * N * C1 * C2 + N * C1 * hw),
        transcendentals=0,
        bytes_accessed=int(xf.nbytes + w.nbytes + bvec.nbytes + N * C2 * itemsize),
    )

    # ---- fast path: whole tensor comfortably fits in VMEM (common head sizes)
    resident_bytes = N * _round_up(C1, 8) * hwp * itemsize
    if resident_bytes <= budget:
        small = (C1 * C2 + C2 + N * C2) * 4
        vmem_limit = min(int(vmem_cap * 0.9),
                         max(resident_bytes + small + 2 * _MIB, 16 * _MIB))
        return pl.pallas_call(
            functools.partial(_classify_single_kernel, inv_hw=1.0 / hw),
            out_shape=jax.ShapeDtypeStruct((N, C2), x.dtype),
            compiler_params=pltpu.CompilerParams(vmem_limit_bytes=vmem_limit),
            cost_estimate=cost,
        )(xf, w, bvec)

    # ---- tiled streaming path -------------------------------------------------
    bn = _pick_batch_tile(N, C1, itemsize, budget)
    nb = N // bn

    # Largest 128-multiple spatial chunk under the budget (no divisibility req.).
    lane_groups = max(budget // (bn * C1 * _LANES * itemsize), 1)
    ts = min(lane_groups * _LANES, hwp)

    total_tiles = pl.cdiv(hw, ts)
    nsplit = 2 if total_tiles >= 2 else 1        # feeds v7x's second TensorCore
    nsteps = pl.cdiv(total_tiles, nsplit)
    need_mask = (hw % ts != 0) or (nsplit * nsteps != total_tiles)

    if nsplit * nsteps > total_tiles:
        # phantom steps: clamp the block index, contributions are masked to zero
        def x_map(bi, p, s):
            return (bi, 0, jnp.minimum(p * nsteps + s, total_tiles - 1))
    else:
        def x_map(bi, p, s):
            return (bi, 0, p * nsteps + s)

    blk_bytes = bn * C1 * ts * itemsize
    small = (C1 * C2 + C2 + nsplit * bn * C2 + bn * C1) * 4 * 2
    vmem_limit = min(int(vmem_cap * 0.9),
                     max(2 * blk_bytes + small + 2 * _MIB, 16 * _MIB))

    part_dtype = x.dtype if nsplit == 1 else jnp.float32

    kernel = functools.partial(
        _classify_tiled_kernel, inv_hw=1.0 / hw, hw=hw, ts=ts,
        nsteps=nsteps, need_mask=need_mask)

    partials = pl.pallas_call(
        kernel,
        out_shape=jax.ShapeDtypeStruct((nsplit, N, C2), part_dtype),
        grid=(nb, nsplit, nsteps),
        in_specs=[
            pl.BlockSpec((bn, C1, ts), x_map),
            pl.BlockSpec((C1, C2), lambda bi, p, s: (0, 0)),
            pl.BlockSpec((1, C2), lambda bi, p, s: (0, 0)),
        ],
        out_specs=pl.BlockSpec((1, bn, C2), lambda bi, p, s: (p, bi, 0)),
        scratch_shapes=[pltpu.VMEM((bn, C1), jnp.float32)],
        compiler_params=pltpu.CompilerParams(
            dimension_semantics=("parallel", "parallel", "arbitrary"),
            vmem_limit_bytes=vmem_limit,
        ),
        cost_estimate=cost,
    )(xf, w, bvec)

    if nsplit == 1:
        return partials[0]
    return jnp.sum(partials, axis=0).astype(x.dtype)


# ----------------------------------------------------------------------------
# public forward (matches Classify.forward semantics, incl. list inputs)
# ----------------------------------------------------------------------------
def classify_forward(x, w, b):
    """x: (N,C1,H,W) array or list of such; w: (C1_total, C2); b: (C2,)."""
    xs = x if isinstance(x, (list, tuple)) else [x]
    out = None
    c_off = 0
    for i, xi in enumerate(xs):
        ci = xi.shape[1]
        wi = w[c_off:c_off + ci]                    # channel slice of the 1x1 conv
        bi = b if i == 0 else jnp.zeros_like(b)     # bias applied exactly once
        yi = _classify_fused(xi, wi, bi)
        out = yi if out is None else out + yi       # cat(pooled)@W == sum of slices
        c_off += ci
    return out


# ----------------------------------------------------------------------------
# pure-JAX reference
# ----------------------------------------------------------------------------
def classify_ref(x, w, b):
    xs = x if isinstance(x, (list, tuple)) else [x]
    pooled = jnp.concatenate([jnp.mean(xi, axis=(2, 3)) for xi in xs], axis=1)
    return pooled @ w + b


# ----------------------------------------------------------------------------
if __name__ == "__main__":
    key = jax.random.PRNGKey(0)
    k1, k2, k3, k4, k5 = jax.random.split(key, 5)

    # 1) single tensor, fast path (whole tensor fits in VMEM)
    N, C1, C2, H, W = 2, 64, 10, 16, 16
    x = jax.random.normal(k1, (N, C1, H, W), jnp.float32)
    w = jax.random.normal(k2, (C1, C2), jnp.float32) * (1.0 / np.sqrt(C1))
    b = jax.random.normal(k3, (C2,), jnp.float32) * 0.1

    out = jax.block_until_ready(classify_forward(x, w, b))
    ref = classify_ref(x, w, b)
    assert out.shape == (N, C2)
    np.testing.assert_allclose(np.asarray(out), np.asarray(ref), rtol=2e-3, atol=2e-3)

    # 2) non-128-multiple spatial (20x20=400) with a tiny forced block budget,
    #    exercising the tiled + 2-way-split + masked-ragged-tail streaming path.
    x3 = jax.random.normal(k4, (N, C1, 20, 20), jnp.float32)
    out3 = jax.block_until_ready(
        _classify_fused(x3, w, b, block_budget_bytes=96 * 1024))
    ref3 = classify_ref(x3, w, b)
    np.testing.assert_allclose(np.asarray(out3), np.asarray(ref3), rtol=2e-3, atol=2e-3)

    # 3) list input (torch.cat of pooled features along channels)
    xa = jax.random.normal(k4, (N, 32, 16, 16), jnp.float32)
    xb = jax.random.normal(k5, (N, 32, 8, 8), jnp.float32)
    w2 = jax.random.normal(k2, (64, C2), jnp.float32) * (1.0 / 8.0)
    out2 = jax.block_until_ready(classify_forward([xa, xb], w2, b))
    ref2 = classify_ref([xa, xb], w2, b)
    assert out2.shape == (N, C2)
    np.testing.assert_allclose(np.asarray(out2), np.asarray(ref2), rtol=2e-3, atol=2e-3)

    print("KERNEL_OK")
</pallas_src>

<mosaic_0001>
module attributes {stable_mosaic.version = 11 : i64} {
  func.func @_classify_single_kernel(%arg0: memref<2x64x256xf32, #tpu.memory_space<vmem>>, %arg1: memref<64x10xf32, #tpu.memory_space<vmem>>, %arg2: memref<1x10xf32, #tpu.memory_space<vmem>>, %arg3: memref<2x10xf32, #tpu.memory_space<vmem>>) attributes {dimension_semantics = [], scalar_prefetch = 0 : i64, scratch_operands = 0 : i64, tpu.core_type = #tpu.core_type<tc>} {
    %c0 = arith.constant 0 : index
    %c0_0 = arith.constant 0 : index
    %c0_1 = arith.constant 0 : index
    %0 = vector.load %arg0[%c0, %c0_0, %c0_1] : memref<2x64x256xf32, #tpu.memory_space<vmem>>, vector<2x64x256xf32>
    %cst = arith.constant dense<0.000000e+00> : vector<2x64xf32>
    %1 = vector.multi_reduction <add>, %0, %cst [2] : vector<2x64x256xf32> to vector<2x64xf32>
    %cst_2 = arith.constant 3.906250e-03 : f32
    %2 = vector.broadcast %cst_2 : f32 to vector<2x64xf32>
    %3 = arith.mulf %1, %2 : vector<2x64xf32>
    %c0_3 = arith.constant 0 : index
    %c0_4 = arith.constant 0 : index
    %4 = vector.load %arg1[%c0_3, %c0_4] : memref<64x10xf32, #tpu.memory_space<vmem>>, vector<64x10xf32>
    %cst_5 = arith.constant dense<0.000000e+00> : vector<2x10xf32>
    %5 = tpu.matmul %3, %4, %cst_5 {dimension_numbers = #tpu.dot_dimension_numbers<[1], [0], [0], [1], [0, 0, 1, 1], [], []>} : vector<2x64xf32>, vector<64x10xf32>, vector<2x10xf32> -> vector<2x10xf32>
    %c0_6 = arith.constant 0 : index
    %c0_7 = arith.constant 0 : index
    %6 = vector.load %arg2[%c0_6, %c0_7] : memref<1x10xf32, #tpu.memory_space<vmem>>, vector<1x10xf32>
    %7 = vector.broadcast %6 : vector<1x10xf32> to vector<2x10xf32>
    %8 = arith.addf %5, %7 : vector<2x10xf32>
    %c0_8 = arith.constant 0 : index
    %c0_9 = arith.constant 0 : index
    %9 = vector.load %arg3[%c0_8, %c0_9] : memref<2x10xf32, #tpu.memory_space<vmem>>, vector<2x10xf32>
    tpu.vector_store %arg3[%c0_8, %c0_9], %8 {strides = array<i32>} : memref<2x10xf32, #tpu.memory_space<vmem>>, vector<2x10xf32>,
    return
  }
}

</mosaic_0001>

<llo_original>
// kernel: tpu_custom_call.1
$region0: #{tpu_custom_call.1}
  #allocation0 [shape = 'u32[]', space=smem, size = 0x4, offset = 0x4, fixed_abs, tag = 'smem constant byte address 0x4 - core index']
  #allocation1 [shape = 'u32[144,128]{1,0:T(1,128)}', space=vmem, size = 0x12000, scoped, tag = 'internal scratch']
  %s0 = inlined_call_operand.hbm [shape: f32[2,64,256], index: 0, kind: input, shape index: {}]
  %s1 = inlined_call_operand.vmem [shape: f32[64,10], index: 1, kind: input, shape index: {}]
  %s2 = inlined_call_operand.vmem [shape: f32[1,10], index: 2, kind: input, shape index: {}]
  %s3 = inlined_call_operand.hbm [shape: f32[2,10], index: 3, kind: output, shape index: {}]
  %s4 = sld [smem:[#allocation0]]
  $region26: #{tpu_custom_call.1} parent=0
    _
  %s6 = ssub.s32 1, %s4
  %s7 = scalar_select 0, %s6, %s4
  $region1: #{tpu_custom_call.1} parent=0
    #allocation2 [shape = 'u8[131072]{0}', space=vmem, size = 0x20000, scoped, tag = 'input window, operand 0, single buffered']
    #allocation3 [shape = 's32[1]{0}', space=sflag, size = 0x4, scoped, tag = 'scoped memory for tpu_custom_call.1']
    #allocation4 [shape = 's32[1]{0}', space=sflag, size = 0x4, scoped, tag = 'scoped memory for tpu_custom_call.1']
    #allocation5 [shape = 'u8[1024]{0}', space=vmem, size = 0x400, scoped, tag = 'output window, operand 0, single buffered']
    %8 = vsyncpa [#allocation3], 0
    %9 = vsyncpa [#allocation4], 0
    // Predicated region
    $region2: #{tpu_custom_call.1} parent=1 // pred_check
      _
    $region3: #{tpu_custom_call.1} parent=1 // pred_check_branch
      %11 = sbr.rel (0) target = $region5
    $region4: #{tpu_custom_call.1} parent=1 // pred_region
      %s13 = ssub.s32 4096, 4096
      %14 = vsyncadd [#allocation3], %s13
      %s15 = sshll.u32 [#allocation2], 4
      %s16 = int_to_ptr.vmem [resolvable:$true] %s15
      %21 = dma.hbm_to_vmem [thread:$0]  %s0, 4096, %s16, [#allocation3], 256, 256, 16
    $region5: #{tpu_custom_call.1} parent=1 // pred_fallthru
      _
    // Predicated region
    $region6: #{tpu_custom_call.1} parent=1 // pred_check
      _
    $region7: #{tpu_custom_call.1} parent=1 // pred_check_branch
      %23 = sbr.rel (0) target = $region9
    $region8: #{tpu_custom_call.1} parent=1 // pred_region
      _
    $region9: #{tpu_custom_call.1} parent=1 // pred_fallthru
      _
    // Predicated region
    $region10: #{tpu_custom_call.1} parent=1 // pred_check
      _
    $region11: #{tpu_custom_call.1} parent=1 // pred_check_branch
      %25 = sbr.rel (0) target = $region13
    $region12: #{tpu_custom_call.1} parent=1 // pred_region
      _
    $region13: #{tpu_custom_call.1} parent=1 // pred_fallthru
      _
    // Predicated region
    $region14: #{tpu_custom_call.1} parent=1 // pred_check
      _
    $region15: #{tpu_custom_call.1} parent=1 // pred_check_branch
      %27 = sbr.rel (0) target = $region17
    $region16: #{tpu_custom_call.1} parent=1 // pred_region
      %28 = dma.done [#allocation3], 4096
    $region17: #{tpu_custom_call.1} parent=1 // pred_fallthru
      _
    %v29 = vld [vmem:[#allocation2] sm:$0xff]
    %v30 = vld [vmem:[#allocation2 + $0x8] sm:$0xff]
    %v31 = vld [vmem:[#allocation2 + $0x10] sm:$0xff]
    %v32 = vld [vmem:[#allocation2 + $0x18] sm:$0xff]
    %v33 = vld [vmem:[#allocation2 + $0x20] sm:$0xff]
    %v34 = vld [vmem:[#allocation2 + $0x28] sm:$0xff]
    %v35 = vld [vmem:[#allocation2 + $0x30] sm:$0xff]
    %v36 = vld [vmem:[#allocation2 + $0x38] sm:$0xff]
    %v37 = vld [vmem:[#allocation2 + $0x40] sm:$0xff]
    %v38 = vld [vmem:[#allocation2 + $0x48] sm:$0xff]
    %v39 = vld [vmem:[#allocation2 + $0x50] sm:$0xff]
    %v40 = vld [vmem:[#allocation2 + $0x58] sm:$0xff]
    %v41 = vld [vmem:[#allocation2 + $0x60] sm:$0xff]
    %v42 = vld [vmem:[#allocation2 + $0x68] sm:$0xff]
    %v43 = vld [vmem:[#allocation2 + $0x70] sm:$0xff]
    %v44 = vld [vmem:[#allocation2 + $0x78] sm:$0xff]
    %v45 = vld [vmem:[#allocation2 + $0x80] sm:$0xff]
    %v46 = vld [vmem:[#allocation2 + $0x88] sm:$0xff]
    %v47 = vld [vmem:[#allocation2 + $0x90] sm:$0xff]
    %v48 = vld [vmem:[#allocation2 + $0x98] sm:$0xff]
    %v49 = vld [vmem:[#allocation2 + $0xa0] sm:$0xff]
    %v50 = vld [vmem:[#allocation2 + $0xa8] sm:$0xff]
    %v51 = vld [vmem:[#allocation2 + $0xb0] sm:$0xff]
    %v52 = vld [vmem:[#allocation2 + $0xb8] sm:$0xff]
    %v53 = vld [vmem:[#allocation2 + $0xc0] sm:$0xff]
    %v54 = vld [vmem:[#allocation2 + $0xc8] sm:$0xff]
    %v55 = vld [vmem:[#allocation2 + $0xd0] sm:$0xff]
    %v56 = vld [vmem:[#allocation2 + $0xd8] sm:$0xff]
    %v57 = vld [vmem:[#allocation2 + $0xe0] sm:$0xff]
    %v58 = vld [vmem:[#allocation2 + $0xe8] sm:$0xff]
    %v59 = vld [vmem:[#allocation2 + $0xf0] sm:$0xff]
    %v60 = vld [vmem:[#allocation2 + $0xf8] sm:$0xff]
    %v61 = vadd.f32 %v29, %v30
    %62 = vadd.xlane.f32.xlu0 %v61
    %v63 = vpop.xlane.xlu0 %62
    %v64 = vadd.f32 %v31, %v32
    %65 = vadd.xlane.f32.xlu0 %v64
    %v66 = vpop.xlane.xlu0 %65
    %v67 = vadd.f32 %v33, %v34
    %68 = vadd.xlane.f32.xlu0 %v67
    %v69 = vpop.xlane.xlu0 %68
    %v70 = vadd.f32 %v35, %v36
    %71 = vadd.xlane.f32.xlu0 %v70
    %v72 = vpop.xlane.xlu0 %71
    %v73 = vadd.f32 %v37, %v38
    %74 = vadd.xlane.f32.xlu0 %v73
    %v75 = vpop.xlane.xlu0 %74
    %v76 = vadd.f32 %v39, %v40
    %77 = vadd.xlane.f32.xlu0 %v76
    %v78 = vpop.xlane.xlu0 %77
    %v79 = vadd.f32 %v41, %v42
    %80 = vadd.xlane.f32.xlu0 %v79
    %v81 = vpop.xlane.xlu0 %80
    %v82 = vadd.f32 %v43, %v44
    %83 = vadd.xlane.f32.xlu0 %v82
    %v84 = vpop.xlane.xlu0 %83
    %v85 = vadd.f32 %v45, %v46
    %86 = vadd.xlane.f32.xlu0 %v85
    %v87 = vpop.xlane.xlu0 %86
    %v88 = vadd.f32 %v47, %v48
    %89 = vadd.xlane.f32.xlu0 %v88
    %v90 = vpop.xlane.xlu0 %89
    %v91 = vadd.f32 %v49, %v50
    %92 = vadd.xlane.f32.xlu0 %v91
    %v93 = vpop.xlane.xlu0 %92
    %v94 = vadd.f32 %v51, %v52
    %95 = vadd.xlane.f32.xlu0 %v94
    %v96 = vpop.xlane.xlu0 %95
    %v97 = vadd.f32 %v53, %v54
    %98 = vadd.xlane.f32.xlu0 %v97
    %v99 = vpop.xlane.xlu0 %98
    %v100 = vadd.f32 %v55, %v56
    %101 = vadd.xlane.f32.xlu0 %v100
    %v102 = vpop.xlane.xlu0 %101
    %v103 = vadd.f32 %v57, %v58
    %104 = vadd.xlane.f32.xlu0 %v103
    %v105 = vpop.xlane.xlu0 %104
    %v106 = vadd.f32 %v59, %v60
    %107 = vadd.xlane.f32.xlu0 %v106
    %v108 = vpop.xlane.xlu0 %107
    %v109 = vmul.f32 %v63, 0.00390625
    %v110 = vmul.f32 %v66, 0.00390625
    %v111 = vmul.f32 %v69, 0.00390625
    %v112 = vmul.f32 %v72, 0.00390625
    %v113 = vmul.f32 %v75, 0.00390625
    %v114 = vmul.f32 %v78, 0.00390625
    %v115 = vmul.f32 %v81, 0.00390625
    %v116 = vmul.f32 %v84, 0.00390625
    %v117 = vmul.f32 %v87, 0.00390625
    %v118 = vmul.f32 %v90, 0.00390625
    %v119 = vmul.f32 %v93, 0.00390625
    %v120 = vmul.f32 %v96, 0.00390625
    %v121 = vmul.f32 %v99, 0.00390625
    %v122 = vmul.f32 %v102, 0.00390625
    %v123 = vmul.f32 %v105, 0.00390625
    %v124 = vmul.f32 %v108, 0.00390625
    %v125 = vld [vmem:[%s1] sm:$0xff]
    %v126 = vld [vmem:[%s1 + $0x8] sm:$0xff]
    %v127 = vld [vmem:[%s1 + $0x10] sm:$0xff]
    %v128 = vld [vmem:[%s1 + $0x18] sm:$0xff]
    %v129 = vld [vmem:[%s1 + $0x20] sm:$0xff]
    %v130 = vld [vmem:[%s1 + $0x28] sm:$0xff]
    %v131 = vld [vmem:[%s1 + $0x30] sm:$0xff]
    %v132 = vld [vmem:[%s1 + $0x38] sm:$0xff]
    %v133 = vld [vmem:[%s2] sm:$0x1]
    %v135 = vlaneseq
    %v136 = vshrl.u32 %v135, 7
    %v137 = vsub.s32 0, %v136
    %v138 = vrot.slane %v133, %v137
    %v156 = vlaneseq
    %v157 = vand.u32 %v156, 127
    %v158 = vlaneseq
    %v159 = vshrl.u32 %v158, 7
    %v160 = vsub.s32 %v157, %v159
    %v161 = vrot.slane %v109, %v160
    %v162 = vadd.s32 %v157, 4294967288
    %v163 = vlaneseq
    %v164 = vshrl.u32 %v163, 7
    %v165 = vsub.s32 %v162, %v164
    %v166 = vrot.slane %v110, %v165
    %vm167 = vcmask 130112
    %v168 = vsel %vm167, %v166, %v161
    %v169 = vadd.s32 %v157, 4294967280
    %v170 = vlaneseq
    %v171 = vshrl.u32 %v170, 7
    %v172 = vsub.s32 %v169, %v171
    %v173 = vrot.slane %v111, %v172
    %vm174 = vcmask 195712
    %v175 = vsel %vm174, %v173, %v168
    %v176 = vadd.s32 %v157, 4294967272
    %v177 = vlaneseq
    %v178 = vshrl.u32 %v177, 7
    %v179 = vsub.s32 %v176, %v178
    %v180 = vrot.slane %v112, %v179
    %vm181 = vcmask 261312
    %v182 = vsel %vm181, %v180, %v175
    %v183 = vadd.s32 %v157, 4294967264
    %v184 = vlaneseq
    %v185 = vshrl.u32 %v184, 7
    %v186 = vsub.s32 %v183, %v185
    %v187 = vrot.slane %v113, %v186
    %vm188 = vcmask 326912
    %v189 = vsel %vm188, %v187, %v182
    %v190 = vadd.s32 %v157, 4294967256
    %v191 = vlaneseq
    %v192 = vshrl.u32 %v191, 7
    %v193 = vsub.s32 %v190, %v192
    %v194 = vrot.slane %v114, %v193
    %vm195 = vcmask 392512
    %v196 = vsel %vm195, %v194, %v189
    %v197 = vadd.s32 %v157, 4294967248
    %v198 = vlaneseq
    %v199 = vshrl.u32 %v198, 7
    %v200 = vsub.s32 %v197, %v199
    %v201 = vrot.slane %v115, %v200
    %vm202 = vcmask 458112
    %v203 = vsel %vm202, %v201, %v196
    %v204 = vadd.s32 %v157, 4294967240
    %v205 = vlaneseq
    %v206 = vshrl.u32 %v205, 7
    %v207 = vsub.s32 %v204, %v206
    %v208 = vrot.slane %v116, %v207
    %vm209 = vcmask 523712
    %v210 = vsel %vm209, %v208, %v203
    %v211 = vlaneseq
    %v212 = vshrl.u32 %v211, 7
    %v213 = vsub.s32 %v157, %v212
    %v214 = vrot.slane %v117, %v213
    %v215 = vlaneseq
    %v216 = vshrl.u32 %v215, 7
    %v217 = vsub.s32 %v162, %v216
    %v218 = vrot.slane %v118, %v217
    %v219 = vsel %vm167, %v218, %v214
    %v220 = vlaneseq
    %v221 = vshrl.u32 %v220, 7
    %v222 = vsub.s32 %v169, %v221
    %v223 = vrot.slane %v119, %v222
    %v224 = vsel %vm174, %v223, %v219
    %v225 = vlaneseq
    %v226 = vshrl.u32 %v225, 7
    %v227 = vsub.s32 %v176, %v226
    %v228 = vrot.slane %v120, %v227
    %v229 = vsel %vm181, %v228, %v224
    %v230 = vlaneseq
    %v231 = vshrl.u32 %v230, 7
    %v232 = vsub.s32 %v183, %v231
    %v233 = vrot.slane %v121, %v232
    %v234 = vsel %vm188, %v233, %v229
    %v235 = vlaneseq
    %v236 = vshrl.u32 %v235, 7
    %v237 = vsub.s32 %v190, %v236
    %v238 = vrot.slane %v122, %v237
    %v239 = vsel %vm195, %v238, %v234
    %v240 = vlaneseq
    %v241 = vshrl.u32 %v240, 7
    %v242 = vsub.s32 %v197, %v241
    %v243 = vrot.slane %v123, %v242
    %v244 = vsel %vm202, %v243, %v239
    %v245 = vlaneseq
    %v246 = vshrl.u32 %v245, 7
    %v247 = vsub.s32 %v204, %v246
    %v248 = vrot.slane %v124, %v247
    %v249 = vsel %vm209, %v248, %v244
    %vm250 = vcmask 1041409
    %v251 = vsel %vm250, %v249, %v210
    %vm252 = vcmask 523264
    %v253 = vsel %vm252, %v251, 0
    %255 = vmatprep.subr.mxu0 0.0
    %256 = vmatpush1.msra.mxu0 %v125
    %257 = vmatprep.subr.mxu0 0.0
    %258 = vmatpush1.msra.mxu0 %v126
    %259 = vmatprep.subr.mxu0 0.0
    %260 = vmatpush1.msra.mxu0 %v127
    %261 = vmatprep.subr.mxu0 0.0
    %262 = vmatpush1.msra.mxu0 %v128
    %263 = vmatprep.subr.mxu0 0.0
    %264 = vmatpush1.msra.mxu0 %v129
    %265 = vmatprep.subr.mxu0 0.0
    %266 = vmatpush1.msra.mxu0 %v130
    %267 = vmatprep.subr.mxu0 0.0
    %268 = vmatpush1.msra.mxu0 %v131
    %269 = vmatprep.subr.mxu0 0.0
    %270 = vmatpush1.msra.mxu0 %v132
    %271 = vmatprep.subr.mxu0 0.0
    %272 = vmatpush1.msra.mxu0 0.0
    %273 = vmatprep.subr.mxu0 0.0
    %274 = vmatpush1.msra.mxu0 0.0
    %275 = vmatprep.subr.mxu0 0.0
    %276 = vmatpush1.msra.mxu0 0.0
    %277 = vmatprep.subr.mxu0 0.0
    %278 = vmatpush1.msra.mxu0 0.0
    %279 = vmatprep.subr.mxu0 0.0
    %280 = vmatpush1.msra.mxu0 0.0
    %281 = vmatprep.subr.mxu0 0.0
    %282 = vmatpush1.msra.mxu0 0.0
    %283 = vmatprep.subr.mxu0 0.0
    %284 = vmatpush1.msra.mxu0 0.0
    %285 = vmatprep.subr.mxu0 0.0
    %286 = vmatpush1.msra.mxu0 0.0
    %287 = vmatprep.subr.mxu0 0.0
    %288 = vmatpush1.msra.mxu0 0.0
    %289 = vmatprep.subr.mxu0 0.0
    %290 = vmatpush1.msra.mxu0 0.0
    %291 = vmatprep.subr.mxu0 0.0
    %292 = vmatpush1.msra.mxu0 0.0
    %293 = vmatprep.subr.mxu0 0.0
    %294 = vmatpush1.msra.mxu0 0.0
    %295 = vmatprep.subr.mxu0 0.0
    %296 = vmatpush1.msra.mxu0 0.0
    %297 = vmatprep.subr.mxu0 0.0
    %298 = vmatpush1.msra.mxu0 0.0
    %299 = vmatprep.subr.mxu0 0.0
    %300 = vmatpush1.msra.mxu0 0.0
    %301 = vmatprep.subr.mxu0 0.0
    %302 = vmatpush1.msra.mxu0 0.0
    %303 = vmatprep.subr.mxu0 0.0
    %304 = vmatpush1.msra.mxu0 0.0
    %305 = vmatprep.subr.mxu0 0.0
    %306 = vmatpush1.msra.mxu0 0.0
    %307 = vmatprep.subr.mxu0 0.0
    %308 = vmatpush1.msra.mxu0 0.0
    %309 = vmatprep.subr.mxu0 0.0
    %310 = vmatpush1.msra.mxu0 0.0
    %311 = vmatprep.subr.mxu0 0.0
    %312 = vmatpush1.msra.mxu0 0.0
    %313 = vmatprep.subr.mxu0 0.0
    %314 = vmatpush1.msra.mxu0 0.0
    %315 = vmatprep.subr.mxu0 0.0
    %316 = vmatpush1.msra.mxu0 0.0
    %317 = vmatprep.subr.mxu0 0.0
    %318 = vmatpush1.msra.mxu0 0.0
    %319 = vmatprep.mubr.f32.mxu0 0.0
    %320 = vmatmul.mubr.f32.gmra.mrb[0].mxu0 %v253
    %v321 = vpop.f32.mrb[0].mxu0
    %v322 = vadd.f32 %v138, %v321
    %v323 = vpop.f32.mrb[0].mxu0
    %324 = vdwg.mxu0
    %vm325 = vcmask 74752
    %326 = vst.msk [vmem:[#allocation5] sm:$0x3] %vm325, %v322
    // Predicated region
    $region18: #{tpu_custom_call.1} parent=1 // pred_check
      _
    $region19: #{tpu_custom_call.1} parent=1 // pred_check_branch
      %328 = sbr.rel (0) target = $region21
    $region20: #{tpu_custom_call.1} parent=1 // pred_region
      %s330 = ssub.s32 32, 32
      %331 = vsyncadd [#allocation4], %s330
      %s333 = sshll.u32 [#allocation5], 4
      %s334 = int_to_ptr.vmem [resolvable:$true] %s333
      %336 = dma.vmem_to_hbm [thread:$0]  %s334, 32, %s3, [#allocation4]
    $region21: #{tpu_custom_call.1} parent=1 // pred_fallthru
      _
    // Predicated region
    $region22: #{tpu_custom_call.1} parent=1 // pred_check
      _
    $region23: #{tpu_custom_call.1} parent=1 // pred_check_branch
      %338 = sbr.rel (0) target = $region25
    $region24: #{tpu_custom_call.1} parent=1 // pred_region
      %339 = dma.done [#allocation4], 32
    $region25: #{tpu_custom_call.1} parent=1 // pred_fallthru
      _
    %340 = vsyncpa [#allocation3], 1
    %341 = vsyncpa [#allocation4], 1

</llo_original>
